<compile_context>
chip_gen: v5e
topology: v5e:2x2
jax: 0.10.0
libtpu: 0.0.40
codegen_flags: <defaults>
</compile_context>

<pallas_src>
import jax
import jax.numpy as jnp
from jax import lax
from jax.experimental import pallas as pl
from jax.experimental.pallas import tpu as pltpu

# small, forward-consistent shapes
B, S, H, V = 8, 8, 32, 64        # batch, seq, hidden, vocab
L0, L1 = 2, 4                    # task-0 / task-1 num_labels (task-0 logits padded with two -100s)
EPS = 0.05                       # CrossEntropyLoss label_smoothing
LANES = 128                      # lane-dense slab / logits width

# packed parameter slab layout: [SLAB_ROWS, 128] f32, all section starts 8-sublane aligned
TOK_OFF = 0            # rows 0:64,   lanes 0:H   token embedding            [V, H]
POS_OFF = 64           # rows 64:72,  lanes 0:H   position embedding         [S, H]
HW0_OFF = 72           # rows 72:104, lanes 0:128 head-0 weight (w0 in lanes 0:L0, rest 0)
HB0_OFF = 104          # row 104,     lanes 0:128 head-0 bias (b0 | -100 pad in lanes L0:L1 | 0)
HW1_OFF = 112          # rows 112:144,lanes 0:128 head-1 weight (w1 in lanes 0:L1, rest 0)
HB1_OFF = 144          # row 144,     lanes 0:128 head-1 bias (b1 in lanes 0:L1, rest 0)
PW_OFF = 152           # rows 152:184,lanes 0:H   pooler weight              [H, H]
PB_OFF = 184           # row 184,     lanes 0:H   pooler bias                [1, H]
SLAB_ROWS = 192


def _multitask_kernel(params_ref, in_ref, logits_ref, loss_ref):
    # ---- packed int inputs (single DMA): [ids | mask | task_id | label] ----
    ids = in_ref[:, 0:S]                                   # (B, S) int32
    maskf = in_ref[:, S:2 * S].astype(jnp.float32)         # (B, S)
    tid = in_ref[:, 2 * S:2 * S + 1]                       # (B, 1) int32
    lab = in_ref[:, 2 * S + 1:2 * S + 2]                   # (B, 1) int32
    is0 = tid == 0                                         # (B, 1) bool

    # ---- packed parameter slab (single dense DMA) ----
    emb_blk = params_ref[0:LANES, 0:H]                     # (128, H): tok rows 0:64, pos rows 64:72,
                                                           # rows 72:127 hit only by zero count lanes
    hw0 = params_ref[HW0_OFF:HW0_OFF + H, :]               # (H, 128)
    hb0 = params_ref[HB0_OFF:HB0_OFF + 1, :]               # (1, 128)
    hw1 = params_ref[HW1_OFF:HW1_OFF + H, :]               # (H, 128)
    hb1 = params_ref[HB1_OFF:HB1_OFF + 1, :]               # (1, 128)
    pool_w = params_ref[PW_OFF:PW_OFF + H, 0:H]            # (H, H)
    pool_b = params_ref[PB_OFF:PB_OFF + 1, 0:H]            # (1, H)

    # ---- synthetic encoder: masked mean of (token + position) embeddings ----
    # TODO(synk): pretrained HF BERT encoder replaced by this deterministic
    # synthetic embedding + masked-mean encoder; pooler/heads/loss match the module.
    # One fused K=128 matmul: count lanes 0:63 = masked one-hot token counts,
    # lanes 64:71 = attention mask (position counts), lanes 72:127 = 0.
    lane = lax.broadcasted_iota(jnp.int32, (B, LANES), 1)
    cnt = jnp.zeros((B, LANES), jnp.float32)
    for s in range(S):                                     # short static unroll, VPU-only
        hit = jnp.logical_or(lane == ids[:, s:s + 1], lane == (V + s))
        cnt = cnt + jnp.where(hit, maskf[:, s:s + 1], 0.0)
    tok_pos_sum = jnp.dot(cnt, emb_blk, preferred_element_type=jnp.float32)   # (B, H)
    denom = jnp.maximum(jnp.sum(maskf, axis=1, keepdims=True), 1.0)           # (B, 1)
    hidden = tok_pos_sum * pl.reciprocal(denom, approx=True)                  # (B, H)

    # ---- BERT pooler: tanh(hidden @ Wp + bp); Dropout(p=0.1) is identity in eval ----
    pooled = jnp.tanh(jnp.dot(hidden, pool_w, preferred_element_type=jnp.float32) + pool_b)

    # ---- classification heads: each pre-padded weight block already places its
    #      task's logits (and the -100 pad for task 0) in lanes 0:L1 ----
    logits0 = jnp.dot(pooled, hw0, preferred_element_type=jnp.float32) + hb0   # (B, 128)
    logits1 = jnp.dot(pooled, hw1, preferred_element_type=jnp.float32) + hb1   # (B, 128)
    routed = jnp.where(is0, logits0, logits1)                                  # (B, 128)
    logits_ref[...] = routed            # lane-dense store; wrapper slices [:, :L1]

    # ---- single routed cross-entropy with label_smoothing = EPS ----
    # Valid lanes: cols < L0 for task-0 rows, cols < L1 for task-1 rows; the rest
    # are masked to -1e30 (exp underflows to 0) and excluded from the smoothing
    # sum; per-row num_classes is used.  (Relies on labels being valid per task,
    # as in PyTorch.)
    valid = jnp.logical_and(lane < L1,
                            jnp.logical_not(jnp.logical_and(is0, lane >= L0)))  # (B, 128)
    x = jnp.where(valid, routed, -1e30)
    m = jnp.max(x, axis=1, keepdims=True)
    lse = m + jnp.log(jnp.sum(jnp.exp(x - m), axis=1, keepdims=True))
    logp = x - lse
    nll = -jnp.sum(jnp.where(lane == lab, logp, 0.0), axis=1, keepdims=True)    # (B, 1)
    smooth = -jnp.sum(jnp.where(valid, logp, 0.0), axis=1, keepdims=True)       # (B, 1)
    eps_over_c = jnp.where(is0, EPS / L0, EPS / L1)                             # (B, 1)
    per_row = (1.0 - EPS) * nll + eps_over_c * smooth                           # (B, 1)

    is0f = is0.astype(jnp.float32)
    is1f = 1.0 - is0f
    tot0 = jnp.sum(per_row * is0f)
    cnt0 = jnp.sum(is0f)
    tot1 = jnp.sum(per_row * is1f)
    cnt1 = jnp.sum(is1f)
    # empty task batch -> PyTorch CE returns nan -> module replaces it with 0
    loss0 = jnp.where(cnt0 > 0.0, tot0 / jnp.maximum(cnt0, 1.0), 0.0)
    loss1 = jnp.where(cnt1 > 0.0, tot1 / jnp.maximum(cnt1, 1.0), 0.0)
    # loss_ave = loss.sum() / len(unique_task_ids_list)
    loss_ref[0, 0] = (loss0 + loss1) * 0.5


def init_params(key):
    ks = jax.random.split(key, 5)
    return {
        # synthetic encoder
        "tok_emb": (0.02 * jax.random.normal(ks[0], (V, H))).astype(jnp.float32),
        "pos_emb": (0.02 * jax.random.normal(ks[1], (S, H))).astype(jnp.float32),
        "pooler_w": (0.02 * jax.random.normal(ks[2], (H, H))).astype(jnp.float32),
        "pooler_b": jnp.zeros((1, H), jnp.float32),
        # ClassificationHead._init_weights: normal(0, 0.02) weights, zero bias
        "w0": (0.02 * jax.random.normal(ks[3], (H, L0))).astype(jnp.float32),
        "b0": jnp.zeros((1, L0), jnp.float32),
        "w1": (0.02 * jax.random.normal(ks[4], (H, L1))).astype(jnp.float32),
        "b1": jnp.zeros((1, L1), jnp.float32),
    }


def pack_params(params):
    """Pack all parameters into one lane-dense [192, 128] f32 slab (done once at init)."""
    hw0 = jnp.zeros((H, LANES), jnp.float32).at[:, 0:L0].set(params["w0"])
    hb0 = (jnp.zeros((1, LANES), jnp.float32)
           .at[:, 0:L0].set(params["b0"])
           .at[:, L0:L1].set(-100.0))                    # pad bias -> -100 pad logits (task 0)
    hw1 = jnp.zeros((H, LANES), jnp.float32).at[:, 0:L1].set(params["w1"])
    hb1 = jnp.zeros((1, LANES), jnp.float32).at[:, 0:L1].set(params["b1"])

    slab = jnp.zeros((SLAB_ROWS, LANES), jnp.float32)
    slab = slab.at[TOK_OFF:TOK_OFF + V, 0:H].set(params["tok_emb"])
    slab = slab.at[POS_OFF:POS_OFF + S, 0:H].set(params["pos_emb"])
    slab = slab.at[HW0_OFF:HW0_OFF + H, :].set(hw0)
    slab = slab.at[HB0_OFF:HB0_OFF + 1, :].set(hb0)
    slab = slab.at[HW1_OFF:HW1_OFF + H, :].set(hw1)
    slab = slab.at[HB1_OFF:HB1_OFF + 1, :].set(hb1)
    slab = slab.at[PW_OFF:PW_OFF + H, 0:H].set(params["pooler_w"])
    slab = slab.at[PB_OFF:PB_OFF + 1, 0:H].set(params["pooler_b"])
    return slab


@jax.jit
def multitask_forward(param_slab, input_ids, attention_mask, task_ids, labels):
    # pack the four small int inputs into ONE array -> one HBM->VMEM DMA
    packed = jnp.concatenate(
        [input_ids.astype(jnp.int32),
         attention_mask.astype(jnp.int32),
         task_ids.reshape(B, 1).astype(jnp.int32),
         labels.reshape(B, 1).astype(jnp.int32)],
        axis=1)                                           # (B, 2S+2) int32

    vmem = pl.BlockSpec(memory_space=pltpu.MemorySpace.VMEM)
    smem = pl.BlockSpec(memory_space=pltpu.MemorySpace.SMEM)
    logits_full, loss = pl.pallas_call(
        _multitask_kernel,
        out_shape=(jax.ShapeDtypeStruct((B, LANES), jnp.float32),   # lane-dense routed logits
                   jax.ShapeDtypeStruct((1, 1), jnp.float32)),      # scalar loss in SMEM
        in_specs=[vmem, vmem],
        out_specs=(vmem, smem),
    )(param_slab, packed)

    # outputs = (loss_ave, task_logits, task_ids); task_logits matches the
    # PyTorch module's stacked [logits0 | -100 pad] / logits1 rows.
    return loss[0, 0], logits_full[:, :L1], task_ids


if __name__ == "__main__":
    key = jax.random.PRNGKey(0)
    k_param, k_ids, k_lab = jax.random.split(key, 3)

    params = init_params(k_param)
    slab = pack_params(params)

    input_ids = jax.random.randint(k_ids, (B, S), 0, V, dtype=jnp.int32)
    attention_mask = jnp.ones((B, S), jnp.int32)
    task_ids = jnp.array([0, 1, 0, 1, 0, 1, 0, 1], jnp.int32)
    # labels valid for each row's task head (task 0 -> [0, L0), task 1 -> [0, L1))
    raw_labels = jax.random.randint(k_lab, (B,), 0, L1, dtype=jnp.int32)
    labels = jnp.where(task_ids == 0, raw_labels % L0, raw_labels)

    loss_ave, task_logits, tids = multitask_forward(
        slab, input_ids, attention_mask, task_ids, labels)
    jax.block_until_ready((loss_ave, task_logits, tids))

    assert task_logits.shape == (B, L1)
    assert loss_ave.shape == ()
    assert bool(jnp.isfinite(loss_ave))
    print("KERNEL_OK")
</pallas_src>

<mosaic_0001>
module attributes {stable_mosaic.version = 11 : i64} {
  func.func @_multitask_kernel(%arg0: memref<192x128xf32, #tpu.memory_space<vmem>>, %arg1: memref<8x18xi32, #tpu.memory_space<vmem>>, %arg2: memref<8x128xf32, #tpu.memory_space<vmem>>, %arg3: memref<1x1xf32, #tpu.memory_space<smem>>) attributes {dimension_semantics = [], scalar_prefetch = 0 : i64, scratch_operands = 0 : i64, tpu.core_type = #tpu.core_type<tc>} {
    %c0 = arith.constant 0 : index
    %c0_0 = arith.constant 0 : index
    %0 = vector.load %arg1[%c0, %c0_0] : memref<8x18xi32, #tpu.memory_space<vmem>>, vector<8x8xi32>
    %c0_1 = arith.constant 0 : index
    %c8 = arith.constant 8 : index
    %1 = vector.load %arg1[%c0_1, %c8] : memref<8x18xi32, #tpu.memory_space<vmem>>, vector<8x8xi32>
    %2 = arith.sitofp %1 : vector<8x8xi32> to vector<8x8xf32>
    %c0_2 = arith.constant 0 : index
    %c16 = arith.constant 16 : index
    %3 = vector.load %arg1[%c0_2, %c16] : memref<8x18xi32, #tpu.memory_space<vmem>>, vector<8x1xi32>
    %c0_3 = arith.constant 0 : index
    %c17 = arith.constant 17 : index
    %4 = vector.load %arg1[%c0_3, %c17] : memref<8x18xi32, #tpu.memory_space<vmem>>, vector<8x1xi32>
    %c0_i32 = arith.constant 0 : i32
    %5 = vector.broadcast %c0_i32 : i32 to vector<8x1xi32>
    %6 = arith.cmpi eq, %3, %5 : vector<8x1xi32>
    %c0_4 = arith.constant 0 : index
    %c0_5 = arith.constant 0 : index
    %7 = vector.load %arg0[%c0_4, %c0_5] : memref<192x128xf32, #tpu.memory_space<vmem>>, vector<128x32xf32>
    %c72 = arith.constant 72 : index
    %c0_6 = arith.constant 0 : index
    %8 = vector.load %arg0[%c72, %c0_6] : memref<192x128xf32, #tpu.memory_space<vmem>>, vector<32x128xf32>
    %c104 = arith.constant 104 : index
    %c0_7 = arith.constant 0 : index
    %9 = vector.load %arg0[%c104, %c0_7] : memref<192x128xf32, #tpu.memory_space<vmem>>, vector<1x128xf32>
    %c112 = arith.constant 112 : index
    %c0_8 = arith.constant 0 : index
    %10 = vector.load %arg0[%c112, %c0_8] : memref<192x128xf32, #tpu.memory_space<vmem>>, vector<32x128xf32>
    %c144 = arith.constant 144 : index
    %c0_9 = arith.constant 0 : index
    %11 = vector.load %arg0[%c144, %c0_9] : memref<192x128xf32, #tpu.memory_space<vmem>>, vector<1x128xf32>
    %c152 = arith.constant 152 : index
    %c0_10 = arith.constant 0 : index
    %12 = vector.load %arg0[%c152, %c0_10] : memref<192x128xf32, #tpu.memory_space<vmem>>, vector<32x32xf32>
    %c184 = arith.constant 184 : index
    %c0_11 = arith.constant 0 : index
    %13 = vector.load %arg0[%c184, %c0_11] : memref<192x128xf32, #tpu.memory_space<vmem>>, vector<1x32xf32>
    %14 = tpu.iota {dimensions = array<i32: 1>} : vector<8x128xi32>
    %cst = arith.constant 0.000000e+00 : f32
    %15 = vector.broadcast %cst : f32 to vector<8x128xf32>
    %16 = vector.extract_strided_slice %0 {offsets = [0, 0], sizes = [8, 1], strides = [1, 1]} : vector<8x8xi32> to vector<8x1xi32>
    %17 = vector.broadcast %16 : vector<8x1xi32> to vector<8x128xi32>
    %18 = arith.cmpi eq, %14, %17 : vector<8x128xi32>
    %c64_i32 = arith.constant 64 : i32
    %19 = vector.broadcast %c64_i32 : i32 to vector<8x128xi32>
    %20 = arith.cmpi eq, %14, %19 : vector<8x128xi32>
    %21 = arith.ori %18, %20 : vector<8x128xi1>
    %22 = vector.extract_strided_slice %2 {offsets = [0, 0], sizes = [8, 1], strides = [1, 1]} : vector<8x8xf32> to vector<8x1xf32>
    %cst_12 = arith.constant 0.000000e+00 : f32
    %23 = vector.shape_cast %22 : vector<8x1xf32> to vector<8x1xf32>
    %24 = vector.broadcast %23 : vector<8x1xf32> to vector<8x128xf32>
    %25 = vector.broadcast %cst_12 : f32 to vector<8x128xf32>
    %26 = arith.select %21, %24, %25 : vector<8x128xi1>, vector<8x128xf32>
    %27 = arith.addf %15, %26 : vector<8x128xf32>
    %28 = vector.extract_strided_slice %0 {offsets = [0, 1], sizes = [8, 1], strides = [1, 1]} : vector<8x8xi32> to vector<8x1xi32>
    %29 = vector.broadcast %28 : vector<8x1xi32> to vector<8x128xi32>
    %30 = arith.cmpi eq, %14, %29 : vector<8x128xi32>
    %c65_i32 = arith.constant 65 : i32
    %31 = vector.broadcast %c65_i32 : i32 to vector<8x128xi32>
    %32 = arith.cmpi eq, %14, %31 : vector<8x128xi32>
    %33 = arith.ori %30, %32 : vector<8x128xi1>
    %34 = vector.extract_strided_slice %2 {offsets = [0, 1], sizes = [8, 1], strides = [1, 1]} : vector<8x8xf32> to vector<8x1xf32>
    %cst_13 = arith.constant 0.000000e+00 : f32
    %35 = vector.shape_cast %34 : vector<8x1xf32> to vector<8x1xf32>
    %36 = vector.broadcast %35 : vector<8x1xf32> to vector<8x128xf32>
    %37 = vector.broadcast %cst_13 : f32 to vector<8x128xf32>
    %38 = arith.select %33, %36, %37 : vector<8x128xi1>, vector<8x128xf32>
    %39 = arith.addf %27, %38 : vector<8x128xf32>
    %40 = vector.extract_strided_slice %0 {offsets = [0, 2], sizes = [8, 1], strides = [1, 1]} : vector<8x8xi32> to vector<8x1xi32>
    %41 = vector.broadcast %40 : vector<8x1xi32> to vector<8x128xi32>
    %42 = arith.cmpi eq, %14, %41 : vector<8x128xi32>
    %c66_i32 = arith.constant 66 : i32
    %43 = vector.broadcast %c66_i32 : i32 to vector<8x128xi32>
    %44 = arith.cmpi eq, %14, %43 : vector<8x128xi32>
    %45 = arith.ori %42, %44 : vector<8x128xi1>
    %46 = vector.extract_strided_slice %2 {offsets = [0, 2], sizes = [8, 1], strides = [1, 1]} : vector<8x8xf32> to vector<8x1xf32>
    %cst_14 = arith.constant 0.000000e+00 : f32
    %47 = vector.shape_cast %46 : vector<8x1xf32> to vector<8x1xf32>
    %48 = vector.broadcast %47 : vector<8x1xf32> to vector<8x128xf32>
    %49 = vector.broadcast %cst_14 : f32 to vector<8x128xf32>
    %50 = arith.select %45, %48, %49 : vector<8x128xi1>, vector<8x128xf32>
    %51 = arith.addf %39, %50 : vector<8x128xf32>
    %52 = vector.extract_strided_slice %0 {offsets = [0, 3], sizes = [8, 1], strides = [1, 1]} : vector<8x8xi32> to vector<8x1xi32>
    %53 = vector.broadcast %52 : vector<8x1xi32> to vector<8x128xi32>
    %54 = arith.cmpi eq, %14, %53 : vector<8x128xi32>
    %c67_i32 = arith.constant 67 : i32
    %55 = vector.broadcast %c67_i32 : i32 to vector<8x128xi32>
    %56 = arith.cmpi eq, %14, %55 : vector<8x128xi32>
    %57 = arith.ori %54, %56 : vector<8x128xi1>
    %58 = vector.extract_strided_slice %2 {offsets = [0, 3], sizes = [8, 1], strides = [1, 1]} : vector<8x8xf32> to vector<8x1xf32>
    %cst_15 = arith.constant 0.000000e+00 : f32
    %59 = vector.shape_cast %58 : vector<8x1xf32> to vector<8x1xf32>
    %60 = vector.broadcast %59 : vector<8x1xf32> to vector<8x128xf32>
    %61 = vector.broadcast %cst_15 : f32 to vector<8x128xf32>
    %62 = arith.select %57, %60, %61 : vector<8x128xi1>, vector<8x128xf32>
    %63 = arith.addf %51, %62 : vector<8x128xf32>
    %64 = vector.extract_strided_slice %0 {offsets = [0, 4], sizes = [8, 1], strides = [1, 1]} : vector<8x8xi32> to vector<8x1xi32>
    %65 = vector.broadcast %64 : vector<8x1xi32> to vector<8x128xi32>
    %66 = arith.cmpi eq, %14, %65 : vector<8x128xi32>
    %c68_i32 = arith.constant 68 : i32
    %67 = vector.broadcast %c68_i32 : i32 to vector<8x128xi32>
    %68 = arith.cmpi eq, %14, %67 : vector<8x128xi32>
    %69 = arith.ori %66, %68 : vector<8x128xi1>
    %70 = vector.extract_strided_slice %2 {offsets = [0, 4], sizes = [8, 1], strides = [1, 1]} : vector<8x8xf32> to vector<8x1xf32>
    %cst_16 = arith.constant 0.000000e+00 : f32
    %71 = vector.shape_cast %70 : vector<8x1xf32> to vector<8x1xf32>
    %72 = vector.broadcast %71 : vector<8x1xf32> to vector<8x128xf32>
    %73 = vector.broadcast %cst_16 : f32 to vector<8x128xf32>
    %74 = arith.select %69, %72, %73 : vector<8x128xi1>, vector<8x128xf32>
    %75 = arith.addf %63, %74 : vector<8x128xf32>
    %76 = vector.extract_strided_slice %0 {offsets = [0, 5], sizes = [8, 1], strides = [1, 1]} : vector<8x8xi32> to vector<8x1xi32>
    %77 = vector.broadcast %76 : vector<8x1xi32> to vector<8x128xi32>
    %78 = arith.cmpi eq, %14, %77 : vector<8x128xi32>
    %c69_i32 = arith.constant 69 : i32
    %79 = vector.broadcast %c69_i32 : i32 to vector<8x128xi32>
    %80 = arith.cmpi eq, %14, %79 : vector<8x128xi32>
    %81 = arith.ori %78, %80 : vector<8x128xi1>
    %82 = vector.extract_strided_slice %2 {offsets = [0, 5], sizes = [8, 1], strides = [1, 1]} : vector<8x8xf32> to vector<8x1xf32>
    %cst_17 = arith.constant 0.000000e+00 : f32
    %83 = vector.shape_cast %82 : vector<8x1xf32> to vector<8x1xf32>
    %84 = vector.broadcast %83 : vector<8x1xf32> to vector<8x128xf32>
    %85 = vector.broadcast %cst_17 : f32 to vector<8x128xf32>
    %86 = arith.select %81, %84, %85 : vector<8x128xi1>, vector<8x128xf32>
    %87 = arith.addf %75, %86 : vector<8x128xf32>
    %88 = vector.extract_strided_slice %0 {offsets = [0, 6], sizes = [8, 1], strides = [1, 1]} : vector<8x8xi32> to vector<8x1xi32>
    %89 = vector.broadcast %88 : vector<8x1xi32> to vector<8x128xi32>
    %90 = arith.cmpi eq, %14, %89 : vector<8x128xi32>
    %c70_i32 = arith.constant 70 : i32
    %91 = vector.broadcast %c70_i32 : i32 to vector<8x128xi32>
    %92 = arith.cmpi eq, %14, %91 : vector<8x128xi32>
    %93 = arith.ori %90, %92 : vector<8x128xi1>
    %94 = vector.extract_strided_slice %2 {offsets = [0, 6], sizes = [8, 1], strides = [1, 1]} : vector<8x8xf32> to vector<8x1xf32>
    %cst_18 = arith.constant 0.000000e+00 : f32
    %95 = vector.shape_cast %94 : vector<8x1xf32> to vector<8x1xf32>
    %96 = vector.broadcast %95 : vector<8x1xf32> to vector<8x128xf32>
    %97 = vector.broadcast %cst_18 : f32 to vector<8x128xf32>
    %98 = arith.select %93, %96, %97 : vector<8x128xi1>, vector<8x128xf32>
    %99 = arith.addf %87, %98 : vector<8x128xf32>
    %100 = vector.extract_strided_slice %0 {offsets = [0, 7], sizes = [8, 1], strides = [1, 1]} : vector<8x8xi32> to vector<8x1xi32>
    %101 = vector.broadcast %100 : vector<8x1xi32> to vector<8x128xi32>
    %102 = arith.cmpi eq, %14, %101 : vector<8x128xi32>
    %c71_i32 = arith.constant 71 : i32
    %103 = vector.broadcast %c71_i32 : i32 to vector<8x128xi32>
    %104 = arith.cmpi eq, %14, %103 : vector<8x128xi32>
    %105 = arith.ori %102, %104 : vector<8x128xi1>
    %106 = vector.extract_strided_slice %2 {offsets = [0, 7], sizes = [8, 1], strides = [1, 1]} : vector<8x8xf32> to vector<8x1xf32>
    %cst_19 = arith.constant 0.000000e+00 : f32
    %107 = vector.shape_cast %106 : vector<8x1xf32> to vector<8x1xf32>
    %108 = vector.broadcast %107 : vector<8x1xf32> to vector<8x128xf32>
    %109 = vector.broadcast %cst_19 : f32 to vector<8x128xf32>
    %110 = arith.select %105, %108, %109 : vector<8x128xi1>, vector<8x128xf32>
    %111 = arith.addf %99, %110 : vector<8x128xf32>
    %cst_20 = arith.constant dense<0.000000e+00> : vector<8x32xf32>
    %112 = tpu.matmul %111, %7, %cst_20 {dimension_numbers = #tpu.dot_dimension_numbers<[1], [0], [0], [1], [0, 0, 1, 1], [], []>} : vector<8x128xf32>, vector<128x32xf32>, vector<8x32xf32> -> vector<8x32xf32>
    %cst_21 = arith.constant dense<0.000000e+00> : vector<8xf32>
    %113 = vector.multi_reduction <add>, %2, %cst_21 [1] : vector<8x8xf32> to vector<8xf32>
    %114 = vector.shape_cast %113 : vector<8xf32> to vector<8x1xf32>
    %cst_22 = arith.constant 1.000000e+00 : f32
    %115 = vector.broadcast %cst_22 : f32 to vector<8x1xf32>
    %116 = arith.maximumf %114, %115 : vector<8x1xf32>
    %117 = tpu.reciprocal %116 {approx = true} : vector<8x1xf32> -> vector<8x1xf32>
    %118 = vector.broadcast %117 : vector<8x1xf32> to vector<8x32xf32>
    %119 = arith.mulf %112, %118 : vector<8x32xf32>
    %cst_23 = arith.constant dense<0.000000e+00> : vector<8x32xf32>
    %120 = tpu.matmul %119, %12, %cst_23 {dimension_numbers = #tpu.dot_dimension_numbers<[1], [0], [0], [1], [0, 0, 1, 1], [], []>} : vector<8x32xf32>, vector<32x32xf32>, vector<8x32xf32> -> vector<8x32xf32>
    %121 = vector.broadcast %13 : vector<1x32xf32> to vector<8x32xf32>
    %122 = arith.addf %120, %121 : vector<8x32xf32>
    %123 = math.tanh %122 : vector<8x32xf32>
    %cst_24 = arith.constant dense<0.000000e+00> : vector<8x128xf32>
    %124 = tpu.matmul %123, %8, %cst_24 {dimension_numbers = #tpu.dot_dimension_numbers<[1], [0], [0], [1], [0, 0, 1, 1], [], []>} : vector<8x32xf32>, vector<32x128xf32>, vector<8x128xf32> -> vector<8x128xf32>
    %125 = vector.broadcast %9 : vector<1x128xf32> to vector<8x128xf32>
    %126 = arith.addf %124, %125 : vector<8x128xf32>
    %cst_25 = arith.constant dense<0.000000e+00> : vector<8x128xf32>
    %127 = tpu.matmul %123, %10, %cst_25 {dimension_numbers = #tpu.dot_dimension_numbers<[1], [0], [0], [1], [0, 0, 1, 1], [], []>} : vector<8x32xf32>, vector<32x128xf32>, vector<8x128xf32> -> vector<8x128xf32>
    %128 = vector.broadcast %11 : vector<1x128xf32> to vector<8x128xf32>
    %129 = arith.addf %127, %128 : vector<8x128xf32>
    %130 = vector.shape_cast %6 : vector<8x1xi1> to vector<8x1xi1>
    %131 = vector.broadcast %130 : vector<8x1xi1> to vector<8x128xi1>
    %132 = arith.select %131, %126, %129 : vector<8x128xi1>, vector<8x128xf32>
    %c0_26 = arith.constant 0 : index
    %c0_27 = arith.constant 0 : index
    %133 = vector.load %arg2[%c0_26, %c0_27] : memref<8x128xf32, #tpu.memory_space<vmem>>, vector<8x128xf32>
    tpu.vector_store %arg2[%c0_26, %c0_27], %132 {strides = array<i32>} : memref<8x128xf32, #tpu.memory_space<vmem>>, vector<8x128xf32>,
    %c4_i32 = arith.constant 4 : i32
    %134 = vector.broadcast %c4_i32 : i32 to vector<8x128xi32>
    %135 = arith.cmpi slt, %14, %134 : vector<8x128xi32>
    %c2_i32 = arith.constant 2 : i32
    %136 = vector.broadcast %c2_i32 : i32 to vector<8x128xi32>
    %137 = arith.cmpi sge, %14, %136 : vector<8x128xi32>
    %138 = vector.broadcast %6 : vector<8x1xi1> to vector<8x128xi1>
    %139 = arith.andi %138, %137 : vector<8x128xi1>
    %cst_28 = arith.constant dense<true> : vector<8x128xi1>
    %140 = arith.xori %139, %cst_28 : vector<8x128xi1>
    %141 = arith.andi %135, %140 : vector<8x128xi1>
    %cst_29 = arith.constant -1.000000e+30 : f32
    %142 = vector.broadcast %cst_29 : f32 to vector<8x128xf32>
    %143 = arith.select %141, %132, %142 : vector<8x128xi1>, vector<8x128xf32>
    %cst_30 = arith.constant dense<0xFF800000> : vector<8xf32>
    %144 = vector.multi_reduction <maximumf>, %143, %cst_30 [1] : vector<8x128xf32> to vector<8xf32>
    %145 = vector.shape_cast %144 : vector<8xf32> to vector<8x1xf32>
    %146 = vector.broadcast %145 : vector<8x1xf32> to vector<8x128xf32>
    %147 = arith.subf %143, %146 : vector<8x128xf32>
    %148 = math.exp %147 : vector<8x128xf32>
    %cst_31 = arith.constant dense<0.000000e+00> : vector<8xf32>
    %149 = vector.multi_reduction <add>, %148, %cst_31 [1] : vector<8x128xf32> to vector<8xf32>
    %150 = vector.shape_cast %149 : vector<8xf32> to vector<8x1xf32>
    %151 = math.log %150 : vector<8x1xf32>
    %152 = arith.addf %145, %151 : vector<8x1xf32>
    %153 = vector.broadcast %152 : vector<8x1xf32> to vector<8x128xf32>
    %154 = arith.subf %143, %153 : vector<8x128xf32>
    %155 = vector.broadcast %4 : vector<8x1xi32> to vector<8x128xi32>
    %156 = arith.cmpi eq, %14, %155 : vector<8x128xi32>
    %cst_32 = arith.constant 0.000000e+00 : f32
    %157 = vector.broadcast %cst_32 : f32 to vector<8x128xf32>
    %158 = arith.select %156, %154, %157 : vector<8x128xi1>, vector<8x128xf32>
    %cst_33 = arith.constant dense<0.000000e+00> : vector<8xf32>
    %159 = vector.multi_reduction <add>, %158, %cst_33 [1] : vector<8x128xf32> to vector<8xf32>
    %160 = vector.shape_cast %159 : vector<8xf32> to vector<8x1xf32>
    %cst_34 = arith.constant 0.000000e+00 : f32
    %161 = vector.broadcast %cst_34 : f32 to vector<8x1xf32>
    %162 = arith.subf %161, %160 : vector<8x1xf32>
    %cst_35 = arith.constant 0.000000e+00 : f32
    %163 = vector.broadcast %cst_35 : f32 to vector<8x128xf32>
    %164 = arith.select %141, %154, %163 : vector<8x128xi1>, vector<8x128xf32>
    %cst_36 = arith.constant dense<0.000000e+00> : vector<8xf32>
    %165 = vector.multi_reduction <add>, %164, %cst_36 [1] : vector<8x128xf32> to vector<8xf32>
    %166 = vector.shape_cast %165 : vector<8xf32> to vector<8x1xf32>
    %cst_37 = arith.constant 0.000000e+00 : f32
    %167 = vector.broadcast %cst_37 : f32 to vector<8x1xf32>
    %168 = arith.subf %167, %166 : vector<8x1xf32>
    %cst_38 = arith.constant 2.500000e-02 : f32
    %cst_39 = arith.constant 1.250000e-02 : f32
    %169 = vector.broadcast %cst_38 : f32 to vector<8x1xf32>
    %170 = vector.broadcast %cst_39 : f32 to vector<8x1xf32>
    %171 = arith.select %6, %169, %170 : vector<8x1xi1>, vector<8x1xf32>
    %cst_40 = arith.constant 0.949999988 : f32
    %172 = vector.broadcast %cst_40 : f32 to vector<8x1xf32>
    %173 = arith.mulf %172, %162 : vector<8x1xf32>
    %174 = arith.mulf %171, %168 : vector<8x1xf32>
    %175 = arith.addf %173, %174 : vector<8x1xf32>
    %176 = arith.extui %6 : vector<8x1xi1> to vector<8x1xi32>
    %177 = arith.sitofp %176 : vector<8x1xi32> to vector<8x1xf32>
    %cst_41 = arith.constant 1.000000e+00 : f32
    %178 = vector.broadcast %cst_41 : f32 to vector<8x1xf32>
    %179 = arith.subf %178, %177 : vector<8x1xf32>
    %180 = arith.mulf %175, %177 : vector<8x1xf32>
    %181 = vector.shape_cast %180 : vector<8x1xf32> to vector<1x8x1xf32>
    %cst_42 = arith.constant dense<0.000000e+00> : vector<1xf32>
    %182 = vector.multi_reduction <add>, %181, %cst_42 [1, 2] : vector<1x8x1xf32> to vector<1xf32>
    %183 = vector.shape_cast %182 : vector<1xf32> to vector<1x1x1xf32>
    %184 = vector.extract %183[0, 0, 0] : f32 from vector<1x1x1xf32>
    %185 = vector.shape_cast %177 : vector<8x1xf32> to vector<1x8x1xf32>
    %cst_43 = arith.constant dense<0.000000e+00> : vector<1xf32>
    %186 = vector.multi_reduction <add>, %185, %cst_43 [1, 2] : vector<1x8x1xf32> to vector<1xf32>
    %187 = vector.shape_cast %186 : vector<1xf32> to vector<1x1x1xf32>
    %188 = vector.extract %187[0, 0, 0] : f32 from vector<1x1x1xf32>
    %189 = arith.mulf %175, %179 : vector<8x1xf32>
    %190 = vector.shape_cast %189 : vector<8x1xf32> to vector<1x8x1xf32>
    %cst_44 = arith.constant dense<0.000000e+00> : vector<1xf32>
    %191 = vector.multi_reduction <add>, %190, %cst_44 [1, 2] : vector<1x8x1xf32> to vector<1xf32>
    %192 = vector.shape_cast %191 : vector<1xf32> to vector<1x1x1xf32>
    %193 = vector.extract %192[0, 0, 0] : f32 from vector<1x1x1xf32>
    %194 = vector.shape_cast %179 : vector<8x1xf32> to vector<1x8x1xf32>
    %cst_45 = arith.constant dense<0.000000e+00> : vector<1xf32>
    %195 = vector.multi_reduction <add>, %194, %cst_45 [1, 2] : vector<1x8x1xf32> to vector<1xf32>
    %196 = vector.shape_cast %195 : vector<1xf32> to vector<1x1x1xf32>
    %197 = vector.extract %196[0, 0, 0] : f32 from vector<1x1x1xf32>
    %cst_46 = arith.constant 0.000000e+00 : f32
    %198 = arith.cmpf ogt, %188, %cst_46 : f32
    %cst_47 = arith.constant 1.000000e+00 : f32
    %199 = arith.maximumf %188, %cst_47 : f32
    %200 = arith.divf %184, %199 : f32
    %cst_48 = arith.constant 0.000000e+00 : f32
    %201 = arith.select %198, %200, %cst_48 : f32
    %cst_49 = arith.constant 0.000000e+00 : f32
    %202 = arith.cmpf ogt, %197, %cst_49 : f32
    %cst_50 = arith.constant 1.000000e+00 : f32
    %203 = arith.maximumf %197, %cst_50 : f32
    %204 = arith.divf %193, %203 : f32
    %cst_51 = arith.constant 0.000000e+00 : f32
    %205 = arith.select %202, %204, %cst_51 : f32
    %206 = arith.addf %201, %205 : f32
    %cst_52 = arith.constant 5.000000e-01 : f32
    %207 = arith.mulf %206, %cst_52 : f32
    %c0_53 = arith.constant 0 : index
    %c0_54 = arith.constant 0 : index
    %208 = memref.load %arg3[%c0_53, %c0_54] : memref<1x1xf32, #tpu.memory_space<smem>>
    memref.store %207, %arg3[%c0_53, %c0_54] : memref<1x1xf32, #tpu.memory_space<smem>>
    return
  }
}

</mosaic_0001>

<llo_original>
// kernel: multitask_forward.1
$region0: #{multitask_forward.1}
  #allocation0 [shape = 'u32[]', space=smem, size = 0x4, offset = 0x4, fixed_abs, tag = 'smem constant byte address 0x4 - core index']
  #allocation1 [shape = 'u32[72,128]{1,0:T(1,128)}', space=vmem, size = 0x9000, scoped, tag = 'internal scratch']
  %s0 = inlined_call_operand.hbm [shape: f32[192,128], index: 0, kind: input, shape index: {}]
  %s1 = inlined_call_operand.vmem [shape: s32[8,18], index: 1, kind: input, shape index: {}]
  %s2 = inlined_call_operand.vmem [shape: f32[8,128], index: 2, kind: output, shape index: {0}]
  %s3 = inlined_call_operand.hbm [shape: f32[1,1], index: 3, kind: output, shape index: {1}]
  %4 = xla_tuple %s2, %s3
  %s5 = sld [smem:[#allocation0]]
  $region30: #{multitask_forward.1} parent=0
    _
  %s7 = ssub.s32 1, %s5
  %s8 = scalar_select 0, %s7, %s5
  $region1: #{multitask_forward.1} parent=0
    #allocation2 [shape = 'u8[98304]{0}', space=vmem, size = 0x18000, scoped, tag = 'input window, operand 0, single buffered']
    #allocation3 [shape = 's32[1]{0}', space=sflag, size = 0x4, scoped, tag = 'scoped memory for multitask_forward.1']
    #allocation4 [shape = 's32[1]{0}', space=sflag, size = 0x4, scoped, tag = 'scoped memory for multitask_forward.1']
    #allocation5 [shape = 'u8[512]{0}', space=smem, size = 0x200, scoped, tag = 'output window, operand 1, single buffered']
    %9 = vsyncpa [#allocation3], 0
    %10 = vsyncpa [#allocation4], 0
    // Predicated region
    $region2: #{multitask_forward.1} parent=1 // pred_check
      _
    $region3: #{multitask_forward.1} parent=1 // pred_check_branch
      %12 = sbr.rel (0) target = $region5
    $region4: #{multitask_forward.1} parent=1 // pred_region
      %14 = vsyncadd [#allocation3], 0
      %s15 = sshll.u32 %s0, 4
      %s16 = int_to_ptr.hbm [resolvable:$true] %s15
      %s17 = sshll.u32 [#allocation2], 4
      %s18 = int_to_ptr.vmem [resolvable:$true] %s17
      %23 = dma.hbm_to_vmem [thread:$0]  %s16, 3072, %s18, [#allocation3], 128, 128, 8
    $region5: #{multitask_forward.1} parent=1 // pred_fallthru
      _
    // Predicated region
    $region6: #{multitask_forward.1} parent=1 // pred_check
      _
    $region7: #{multitask_forward.1} parent=1 // pred_check_branch
      %25 = sbr.rel (0) target = $region9
    $region8: #{multitask_forward.1} parent=1 // pred_region
      _
    $region9: #{multitask_forward.1} parent=1 // pred_fallthru
      _
    // Predicated region
    $region10: #{multitask_forward.1} parent=1 // pred_check
      _
    $region11: #{multitask_forward.1} parent=1 // pred_check_branch
      %27 = sbr.rel (0) target = $region13
    $region12: #{multitask_forward.1} parent=1 // pred_region
      %29 = dma.done [#allocation3], 3072
    $region13: #{multitask_forward.1} parent=1 // pred_fallthru
      _
    %v30 = vld [vmem:[%s1] sm:$0xff]
    %v31 = vcvt.s32.f32 %v30
    %vm32 = vcmp.eq.s32.totalorder %v30, 0
    %v33 = vld [vmem:[#allocation2] sm:$0xff]
    %v34 = vld [vmem:[#allocation2 + $0x8] sm:$0xff]
    %v35 = vld [vmem:[#allocation2 + $0x10] sm:$0xff]
    %v36 = vld [vmem:[#allocation2 + $0x18] sm:$0xff]
    %v37 = vld [vmem:[#allocation2 + $0x20] sm:$0xff]
    %v38 = vld [vmem:[#allocation2 + $0x28] sm:$0xff]
    %v39 = vld [vmem:[#allocation2 + $0x30] sm:$0xff]
    %v40 = vld [vmem:[#allocation2 + $0x38] sm:$0xff]
    %v41 = vld [vmem:[#allocation2 + $0x40] sm:$0xff]
    %v42 = vld [vmem:[#allocation2 + $0x48] sm:$0xff]
    %v43 = vld [vmem:[#allocation2 + $0x50] sm:$0xff]
    %v44 = vld [vmem:[#allocation2 + $0x58] sm:$0xff]
    %v45 = vld [vmem:[#allocation2 + $0x60] sm:$0xff]
    %v46 = vld [vmem:[#allocation2 + $0x68] sm:$0xff]
    %v47 = vld [vmem:[#allocation2 + $0x70] sm:$0xff]
    %v48 = vld [vmem:[#allocation2 + $0x78] sm:$0xff]
    %v49 = vld [vmem:[#allocation2 + $0x68] sm:$0x1]
    %v50 = vld [vmem:[#allocation2 + $0x80] sm:$0xff]
    %v51 = vld [vmem:[#allocation2 + $0x88] sm:$0xff]
    %v52 = vld [vmem:[#allocation2 + $0x90] sm:$0x1]
    %v53 = vld [vmem:[#allocation2 + $0x98] sm:$0xff]
    %v54 = vld [vmem:[#allocation2 + $0xa0] sm:$0xff]
    %v55 = vld [vmem:[#allocation2 + $0xa8] sm:$0xff]
    %v56 = vld [vmem:[#allocation2 + $0xb0] sm:$0xff]
    %v57 = vld [vmem:[#allocation2 + $0xb8] sm:$0x1]
    %v58 = vlaneseq
    %v59 = vand.u32 %v58, 127
    %60 = vset.pattern.permute.xlu0 0
    %61 = vperm.xlu0 %60, %v30
    %v62 = vpop.permute.xlu0 %61
    %vm63 = vcmp.eq.s32.totalorder %v59, %v62
    %vm64 = vcmp.eq.s32.totalorder %v59, 64
    %vm65 = vmor %vm63, %vm64
    %67 = vset.pattern.permute.xlu0 8
    %68 = vperm.xlu0 %67, %v31
    %v69 = vpop.permute.xlu0 %68
    %v71 = vsel %vm65, %v69, 0.0
    %v72 = vadd.f32 %v71, 0.0
    %73 = vset.pattern.permute.xlu0 1
    %74 = vperm.xlu0 %73, %v30
    %v75 = vpop.permute.xlu0 %74
    %vm76 = vcmp.eq.s32.totalorder %v59, %v75
    %vm77 = vcmp.eq.s32.totalorder %v59, 65
    %vm78 = vmor %vm76, %vm77
    %79 = vset.pattern.permute.xlu0 9
    %80 = vperm.xlu0 %79, %v31
    %v81 = vpop.permute.xlu0 %80
    %v83 = vsel %vm78, %v81, 0.0
    %v84 = vadd.f32 %v72, %v83
    %85 = vset.pattern.permute.xlu0 2
    %86 = vperm.xlu0 %85, %v30
    %v87 = vpop.permute.xlu0 %86
    %vm88 = vcmp.eq.s32.totalorder %v59, %v87
    %vm89 = vcmp.eq.s32.totalorder %v59, 66
    %vm90 = vmor %vm88, %vm89
    %91 = vset.pattern.permute.xlu0 10
    %92 = vperm.xlu0 %91, %v31
    %v93 = vpop.permute.xlu0 %92
    %v95 = vsel %vm90, %v93, 0.0
    %v96 = vadd.f32 %v84, %v95
    %97 = vset.pattern.permute.xlu0 3
    %98 = vperm.xlu0 %97, %v30
    %v99 = vpop.permute.xlu0 %98
    %vm100 = vcmp.eq.s32.totalorder %v59, %v99
    %vm101 = vcmp.eq.s32.totalorder %v59, 67
    %vm102 = vmor %vm100, %vm101
    %103 = vset.pattern.permute.xlu0 11
    %104 = vperm.xlu0 %103, %v31
    %v105 = vpop.permute.xlu0 %104
    %v107 = vsel %vm102, %v105, 0.0
    %v108 = vadd.f32 %v96, %v107
    %109 = vset.pattern.permute.xlu0 4
    %110 = vperm.xlu0 %109, %v30
    %v111 = vpop.permute.xlu0 %110
    %vm112 = vcmp.eq.s32.totalorder %v59, %v111
    %vm113 = vcmp.eq.s32.totalorder %v59, 68
    %vm114 = vmor %vm112, %vm113
    %115 = vset.pattern.permute.xlu0 12
    %116 = vperm.xlu0 %115, %v31
    %v117 = vpop.permute.xlu0 %116
    %v119 = vsel %vm114, %v117, 0.0
    %v120 = vadd.f32 %v108, %v119
    %121 = vset.pattern.permute.xlu0 5
    %122 = vperm.xlu0 %121, %v30
    %v123 = vpop.permute.xlu0 %122
    %vm124 = vcmp.eq.s32.totalorder %v59, %v123
    %vm125 = vcmp.eq.s32.totalorder %v59, 69
    %vm126 = vmor %vm124, %vm125
    %127 = vset.pattern.permute.xlu0 13
    %128 = vperm.xlu0 %127, %v31
    %v129 = vpop.permute.xlu0 %128
    %v131 = vsel %vm126, %v129, 0.0
    %v132 = vadd.f32 %v120, %v131
    %133 = vset.pattern.permute.xlu0 6
    %134 = vperm.xlu0 %133, %v30
    %v135 = vpop.permute.xlu0 %134
    %vm136 = vcmp.eq.s32.totalorder %v59, %v135
    %vm137 = vcmp.eq.s32.totalorder %v59, 70
    %vm138 = vmor %vm136, %vm137
    %139 = vset.pattern.permute.xlu0 14
    %140 = vperm.xlu0 %139, %v31
    %v141 = vpop.permute.xlu0 %140
    %v143 = vsel %vm138, %v141, 0.0
    %v144 = vadd.f32 %v132, %v143
    %145 = vset.pattern.permute.xlu0 7
    %146 = vperm.xlu0 %145, %v30
    %v147 = vpop.permute.xlu0 %146
    %vm148 = vcmp.eq.s32.totalorder %v59, %v147
    %vm149 = vcmp.eq.s32.totalorder %v59, 71
    %vm150 = vmor %vm148, %vm149
    %151 = vset.pattern.permute.xlu0 15
    %152 = vperm.xlu0 %151, %v31
    %v153 = vpop.permute.xlu0 %152
    %v155 = vsel %vm150, %v153, 0.0
    %v156 = vadd.f32 %v144, %v155
    %157 = vmatpush.msra.mxu0 %v48
    %158 = vmatpush.msra.mxu0 %v47
    %159 = vmatpush.msra.mxu0 %v46
    %160 = vmatpush.msra.mxu0 %v45
    %161 = vmatpush.msra.mxu0 %v44
    %162 = vmatpush.msra.mxu0 %v43
    %163 = vmatpush.msra.mxu0 %v42
    %164 = vmatpush.msra.mxu0 %v41
    %165 = vmatpush.msra.mxu0 %v40
    %166 = vmatpush.msra.mxu0 %v39
    %167 = vmatpush.msra.mxu0 %v38
    %168 = vmatpush.msra.mxu0 %v37
    %169 = vmatpush.msra.mxu0 %v36
    %170 = vmatpush.msra.mxu0 %v35
    %171 = vmatpush.msra.mxu0 %v34
    %172 = vmatpush.msra.mxu0 %v33
    %173 = vmatmul.f32.gmra.mxu0 %v156
    %v174 = vpop.f32.mrf.mxu0
    %v175 = vadd.f32 0.0, %v174
    %176 = vdwg.mxu0
    %177 = vrot.lane.b32.xlu0 %v31, 120
    %v178 = vpop.permute.xlu0 %177
    %vm180 = vcmask 64512
    %v181 = vsel %vm180, %v178, 0.0
    %182 = vadd.xlane.f32.xlu0 %v181
    %v183 = vpop.xlane.xlu0 %182
    %v184 = vmax.f32 %v183, 1.0
    %v185 = vrcp.pop %v184
    %v186 = vmul.f32 %v175, %v185
    %v187 = vperm.slane %v57, 0
    %vm188 = vcmask 261120
    %v190 = vsel %vm188, %v186, 0
    %192 = vmatpush.msra.mxu0 0.0
    %193 = vmatpush.msra.mxu0 0.0
    %194 = vmatpush.msra.mxu0 0.0
    %195 = vmatpush.msra.mxu0 0.0
    %196 = vmatpush.msra.mxu0 0.0
    %197 = vmatpush.msra.mxu0 0.0
    %198 = vmatpush.msra.mxu0 0.0
    %199 = vmatpush.msra.mxu0 0.0
    %200 = vmatpush.msra.mxu0 0.0
    %201 = vmatpush.msra.mxu0 0.0
    %202 = vmatpush.msra.mxu0 0.0
    %203 = vmatpush.msra.mxu0 0.0
    %204 = vmatpush.msra.mxu0 %v56
    %205 = vmatpush.msra.mxu0 %v55
    %206 = vmatpush.msra.mxu0 %v54
    %207 = vmatpush.msra.mxu0 %v53
    %208 = vmatmul.f32.gmra.mxu0 %v190
    %v209 = vpop.f32.mrf.mxu0
    %v210 = vadd.f32 %v187, %v209
    %211 = vdwg.mxu0
    %v212 = vtanh.pop %v210
    %v213 = vperm.slane %v49, 0
    %v215 = vsel %vm188, %v212, 0
    %217 = vmatpush.msra.mxu0 0.0
    %218 = vmatpush.msra.mxu0 0.0
    %219 = vmatpush.msra.mxu0 0.0
    %220 = vmatpush.msra.mxu0 0.0
    %221 = vmatpush.msra.mxu0 0.0
    %222 = vmatpush.msra.mxu0 0.0
    %223 = vmatpush.msra.mxu0 0.0
    %224 = vmatpush.msra.mxu0 0.0
    %225 = vmatpush.msra.mxu0 0.0
    %226 = vmatpush.msra.mxu0 0.0
    %227 = vmatpush.msra.mxu0 0.0
    %228 = vmatpush.msra.mxu0 0.0
    %229 = vmatpush.msra.mxu0 %v45
    %230 = vmatpush.msra.mxu0 %v44
    %231 = vmatpush.msra.mxu0 %v43
    %232 = vmatpush.msra.mxu0 %v42
    %233 = vmatmul.f32.gmra.mxu0 %v215
    %v234 = vpop.f32.mrf.mxu0
    %v235 = vadd.f32 %v213, %v234
    %236 = vdwg.mxu0
    %v237 = vperm.slane %v52, 0
    %238 = vmatpush.msra.mxu0 0.0
    %239 = vmatpush.msra.mxu0 0.0
    %240 = vmatpush.msra.mxu0 0.0
    %241 = vmatpush.msra.mxu0 0.0
    %242 = vmatpush.msra.mxu0 0.0
    %243 = vmatpush.msra.mxu0 0.0
    %244 = vmatpush.msra.mxu0 0.0
    %245 = vmatpush.msra.mxu0 0.0
    %246 = vmatpush.msra.mxu0 0.0
    %247 = vmatpush.msra.mxu0 0.0
    %248 = vmatpush.msra.mxu0 0.0
    %249 = vmatpush.msra.mxu0 0.0
    %250 = vmatpush.msra.mxu0 %v51
    %251 = vmatpush.msra.mxu0 %v50
    %252 = vmatpush.msra.mxu0 %v48
    %253 = vmatpush.msra.mxu0 %v47
    %254 = vmatmul.f32.gmra.mxu0 %v215
    %v255 = vpop.f32.mrf.mxu0
    %v256 = vadd.f32 %v237, %v255
    %257 = vdwg.mxu0
    %v258 = vsel %vm32, 1, 0
    %259 = vset.pattern.permute.xlu0 16
    %260 = vperm.xlu0 %259, %v258
    %v261 = vpop.permute.xlu0 %260
    %vm262 = vcmp.eq.s32.totalorder %v261, 1
    %v263 = vsel %vm262, %v235, %v256
    %264 = vst [vmem:[%s2] sm:$0xff] %v263
    %vm265 = vcmp.lt.s32.totalorder %v59, 4
    %vm266 = vcmp.ge.s32.totalorder %v59, 2
    %vm267 = vmand %vm262, %vm266
    %vm268 = vmxor %vm267, 1
    %vm269 = vmand %vm265, %vm268
    %v270 = vsel %vm269, %v263, -1e+30
    %271 = vmax.xlane.f32.xlu0 %v270
    %v272 = vpop.xlane.xlu0 %271
    %v273 = vsub.f32 %v270, %v272
    %v274 = vmul.f32 %v273, 1.442695
    %v275 = vpow.pop %v274
    %276 = vadd.xlane.f32.xlu0 %v275
    %v277 = vpop.xlane.xlu0 %276
    %v278 = vlog2.pop %v277
    %v279 = vmul.f32 %v278, 0.6931472
    %v280 = vadd.f32 %v272, %v279
    %v281 = vsub.f32 %v270, %v280
    %282 = vset.pattern.permute.xlu0 17
    %283 = vperm.xlu0 %282, %v30
    %v284 = vpop.permute.xlu0 %283
    %vm285 = vcmp.eq.s32.totalorder %v59, %v284
    %v286 = vsel %vm285, %v281, 0.0
    %287 = vadd.xlane.f32.xlu0 %v286
    %v288 = vpop.xlane.xlu0 %287
    %v289 = vsub.f32 0.0, %v288
    %v290 = vsel %vm269, %v281, 0.0
    %291 = vadd.xlane.f32.xlu0 %v290
    %v292 = vpop.xlane.xlu0 %291
    %v293 = vsub.f32 0.0, %v292
    %v294 = vsel %vm32, 0.025, 0.0125
    %v295 = vmul.f32 %v289, 0.95
    %v296 = vmul.f32 %v294, %v293
    %v297 = vadd.f32 %v295, %v296
    %v298 = vcvt.s32.f32 %v258
    %v299 = vsub.f32 1.0, %v298
    %v300 = vmul.f32 %v297, %v298
    %302 = vrot.lane.b32.xlu0 %v300, 112
    %v303 = vpop.permute.xlu0 %302
    %vm305 = vcmask 7168
    %v306 = vsel %vm305, %v303, 0.0
    %307 = vadd.xlane.f32.xlu0 %v306
    %v308 = vpop.xlane.xlu0 %307
    %v309 = vrot.slane %v308, 4
    %v310 = vadd.f32 %v308, %v309
    %v311 = vrot.slane %v310, 2
    %v312 = vadd.f32 %v310, %v311
    %v313 = vrot.slane %v312, 1
    %v314 = vadd.f32 %v312, %v313
    %s315 = vtos %v314
    %317 = vrot.lane.b32.xlu0 %v298, 112
    %v318 = vpop.permute.xlu0 %317
    %v320 = vsel %vm305, %v318, 0.0
    %321 = vadd.xlane.f32.xlu0 %v320
    %v322 = vpop.xlane.xlu0 %321
    %v323 = vrot.slane %v322, 4
    %v324 = vadd.f32 %v322, %v323
    %v325 = vrot.slane %v324, 2
    %v326 = vadd.f32 %v324, %v325
    %v327 = vrot.slane %v326, 1
    %v328 = vadd.f32 %v326, %v327
    %s329 = vtos %v328
    %v330 = vmul.f32 %v297, %v299
    %332 = vrot.lane.b32.xlu0 %v330, 112
    %v333 = vpop.permute.xlu0 %332
    %v335 = vsel %vm305, %v333, 0.0
    %336 = vadd.xlane.f32.xlu0 %v335
    %v337 = vpop.xlane.xlu0 %336
    %v338 = vrot.slane %v337, 4
    %v339 = vadd.f32 %v337, %v338
    %v340 = vrot.slane %v339, 2
    %v341 = vadd.f32 %v339, %v340
    %v342 = vrot.slane %v341, 1
    %v343 = vadd.f32 %v341, %v342
    %s344 = vtos %v343
    %346 = vrot.lane.b32.xlu0 %v299, 112
    %v347 = vpop.permute.xlu0 %346
    %v349 = vsel %vm305, %v347, 0.0
    %350 = vadd.xlane.f32.xlu0 %v349
    %v351 = vpop.xlane.xlu0 %350
    %v352 = vrot.slane %v351, 4
    %v353 = vadd.f32 %v351, %v352
    %v354 = vrot.slane %v353, 2
    %v355 = vadd.f32 %v353, %v354
    %v356 = vrot.slane %v355, 1
    %v357 = vadd.f32 %v355, %v356
    %s358 = vtos %v357
    %p359 = scmp.gt.f32.partialorder %s329, 0.0
    %s360 = smax.f32 %s329, 1.0
    %v361 = vstv %s360
    %v362 = vrcp.pop %v361
    %v363 = vmul.f32 %v361, %v362
    %v364 = vsub.f32 1.0, %v363
    %v365 = vmul.f32 %v362, %v364
    %v366 = vadd.f32 %v362, %v365
    %vm367 = vweird.f32 %v361
    %vm368 = vweird.f32 %v362
    %vm369 = vmor %vm367, %vm368
    %v370 = vsel %vm369, %v362, %v366
    %v371 = vand.u32 2147483647, %v361
    %vm372 = vcmp.eq.f32.partialorder %v371, 8.507059e+37
    %v373 = vand.u32 %v361, 2147483648
    %v374 = vor.u32 1.1754944e-38, %v373
    %v375 = vsel %vm372, %v374, %v370
    %s376 = vtos %v375
    %s377 = smul.f32 %s315, %s376
    %s378 = scalar_select %p359, %s377, 0.0
    %p379 = scmp.gt.f32.partialorder %s358, 0.0
    %s380 = smax.f32 %s358, 1.0
    %v381 = vstv %s380
    %v382 = vrcp.pop %v381
    %v383 = vmul.f32 %v381, %v382
    %v384 = vsub.f32 1.0, %v383
    %v385 = vmul.f32 %v382, %v384
    %v386 = vadd.f32 %v382, %v385
    %vm387 = vweird.f32 %v381
    %vm388 = vweird.f32 %v382
    %vm389 = vmor %vm387, %vm388
    %v390 = vsel %vm389, %v382, %v386
    %v391 = vand.u32 2147483647, %v381
    %vm392 = vcmp.eq.f32.partialorder %v391, 8.507059e+37
    %v393 = vand.u32 %v381, 2147483648
    %v394 = vor.u32 1.1754944e-38, %v393
    %v395 = vsel %vm392, %v394, %v390
    %s396 = vtos %v395
    %s397 = smul.f32 %s344, %s396
    %s398 = scalar_select %p379, %s397, 0.0
    %s399 = sadd.f32 %s378, %s398
    %s400 = smul.f32 %s399, 0.5
    %s401 = scalar_lea.smem [#allocation5], 0
    %402 = sst [smem:[%s401]] %s400
    // Predicated region
    $region14: #{multitask_forward.1} parent=1 // pred_check
      _
    $region15: #{multitask_forward.1} parent=1 // pred_check_branch
      %404 = sbr.rel (0) target = $region17
    $region16: #{multitask_forward.1} parent=1 // pred_region
      _
    $region17: #{multitask_forward.1} parent=1 // pred_fallthru
      _
    // Predicated region
    $region18: #{multitask_forward.1} parent=1 // pred_check
      _
    $region19: #{multitask_forward.1} parent=1 // pred_check_branch
      %406 = sbr.rel (0) target = $region21
    $region20: #{multitask_forward.1} parent=1 // pred_region
      %408 = vsyncadd [#allocation4], 0
      %s410 = sshll.u32 %s3, 4
      %s411 = int_to_ptr.hbm [resolvable:$true] %s410
      %413 = dma.smem_to_hbm [#allocation5], 16, %s411, [#allocation4]
    $region21: #{multitask_forward.1} parent=1 // pred_fallthru
      _
    // Predicated region
    $region22: #{multitask_forward.1} parent=1 // pred_check
      _
    $region23: #{multitask_forward.1} parent=1 // pred_check_branch
      %415 = sbr.rel (0) target = $region25
    $region24: #{multitask_forward.1} parent=1 // pred_region
      _
    $region25: #{multitask_forward.1} parent=1 // pred_fallthru
      _
    // Predicated region
    $region26: #{multitask_forward.1} parent=1 // pred_check
      _
    $region27: #{multitask_forward.1} parent=1 // pred_check_branch
      %417 = sbr.rel (0) target = $region29
    $region28: #{multitask_forward.1} parent=1 // pred_region
      %419 = dma.done [#allocation4], 16
    $region29: #{multitask_forward.1} parent=1 // pred_fallthru
      _
    %420 = sfence
    %421 = vsyncpa [#allocation3], 1
    %422 = vsyncpa [#allocation4], 1

</llo_original>
